<compile_context>
chip_gen: v7x
topology: tpu7x:2x2x1
jax: 0.10.0
libtpu: 0.0.40
codegen_flags: <defaults>
</compile_context>

<pallas_src>
import functools
import math

import jax
import jax.numpy as jnp
from jax.experimental import pallas as pl
from jax.experimental.pallas import tpu as pltpu

_NEG_BIG = -1e30  # finite "-inf" for masked (padded) vocab columns


def _generator_kernel(x_ref, w_ref, b_ref, o_ref, *, vocab):
    # x_ref: (TM, D) bf16   w_ref: (D, Vp) bf16   b_ref: (1, Vp) f32
    # o_ref: (TM, Vp) f32
    x = x_ref[...]
    w = w_ref[...]
    b = b_ref[...].astype(jnp.float32)

    # Linear projection on the MXU: bf16 inputs, f32 accumulation.
    logits = jnp.dot(x, w, preferred_element_type=jnp.float32) + b  # (TM, Vp)

    # Mask padded vocab columns so they can't affect max / sum.
    vp = logits.shape[-1]
    if vp != vocab:
        col = jax.lax.broadcasted_iota(jnp.int32, logits.shape, dimension=1)
        logits = jnp.where(col < vocab, logits, jnp.float32(_NEG_BIG))

    # Numerically stable log_softmax over the vocab (lane) axis, in f32.
    m = jnp.max(logits, axis=-1, keepdims=True)
    shifted = logits - m
    lse = jnp.log(jnp.sum(jnp.exp(shifted), axis=-1, keepdims=True))
    o_ref[...] = (shifted - lse).astype(o_ref.dtype)


def _round_up(x, m):
    return ((x + m - 1) // m) * m


def generator_forward(
    x,
    weight_t,
    bias,
    *,
    tm=256,
    compute_dtype=jnp.bfloat16,
    out_dtype=jnp.float32,
):
    """log_softmax(x @ weight_t + bias, axis=-1).

    x: (..., d_model), weight_t: (d_model, vocab), bias: (vocab,).
    """
    *lead, d_model = x.shape
    vocab = weight_t.shape[1]
    m = math.prod(lead) if lead else 1

    # --- tile / padding plan -------------------------------------------------
    vp = _round_up(vocab, 128)              # lane-dense output columns
    tm = _round_up(min(tm, m), 8)           # token-tile rows (sublane multiple)
    mp = _round_up(m, tm)                   # padded token count
    grid_m = mp // tm

    x2d = x.reshape(m, d_model)
    if mp != m:
        x2d = jnp.pad(x2d, ((0, mp - m), (0, 0)))
    w2d = weight_t
    b1d = bias
    if vp != vocab:
        w2d = jnp.pad(w2d, ((0, 0), (0, vp - vocab)))
        b1d = jnp.pad(b1d, (0, vp - vocab))

    # Cast once in the wrapper: MXU consumes bf16, bias stays f32.
    x2d = x2d.astype(compute_dtype)
    w2d = w2d.astype(compute_dtype)
    b2d = b1d.reshape(1, vp).astype(jnp.float32)

    # --- VMEM budget (double-buffered x/out tiles + resident weight) --------
    cb = jnp.dtype(compute_dtype).itemsize
    ob = jnp.dtype(out_dtype).itemsize
    vmem_need = (
        2 * tm * d_model * cb      # x tiles (double buffer)
        + 2 * d_model * vp * cb    # weight (conservatively x2)
        + 2 * vp * 4               # bias
        + 2 * tm * vp * ob         # output tiles (double buffer)
    )
    vmem_limit = min(max(int(vmem_need * 1.5), 32 * 1024 * 1024),
                     64 * 1024 * 1024)

    kernel = functools.partial(_generator_kernel, vocab=vocab)

    out = pl.pallas_call(
        kernel,
        out_shape=jax.ShapeDtypeStruct((mp, vp), out_dtype),
        grid=(grid_m,),
        in_specs=[
            pl.BlockSpec((tm, d_model), lambda i: (i, 0)),   # streamed x tile
            pl.BlockSpec((d_model, vp), lambda i: (0, 0)),   # resident weight
            pl.BlockSpec((1, vp), lambda i: (0, 0)),         # resident bias
        ],
        out_specs=pl.BlockSpec((tm, vp), lambda i: (i, 0)),
        compiler_params=pltpu.CompilerParams(
            dimension_semantics=("parallel",),
            vmem_limit_bytes=vmem_limit,
        ),
    )(x2d, w2d, b2d)

    out = out[:m, :vocab]
    return out.reshape(*lead, vocab)


if __name__ == "__main__":
    # Small shapes consistent with the module: batch=2, seq=8, d_model=32, vocab=64.
    batch, seq, d_model, vocab = 2, 8, 32, 64

    key = jax.random.PRNGKey(0)
    kx, kw, kb = jax.random.split(key, 3)

    # Deterministic parameter init mimicking nn.Linear defaults:
    # U(-1/sqrt(d_model), 1/sqrt(d_model)).  PyTorch stores (vocab, d_model);
    # we keep the transposed (d_model, vocab) layout.
    bound = 1.0 / (d_model ** 0.5)
    weight_t = jax.random.uniform(
        kw, (d_model, vocab), dtype=jnp.float32, minval=-bound, maxval=bound
    )
    bias = jax.random.uniform(
        kb, (vocab,), dtype=jnp.float32, minval=-bound, maxval=bound
    )
    x = jax.random.normal(kx, (batch, seq, d_model), dtype=jnp.float32)

    out = generator_forward(x, weight_t, bias)
    out = jax.block_until_ready(out)
    assert out.shape == (batch, seq, vocab)

    # Reference with the same bf16-input / f32-accumulate compute path.
    xb = x.reshape(-1, d_model).astype(jnp.bfloat16)
    wb = weight_t.astype(jnp.bfloat16)
    logits_ref = jnp.dot(xb, wb, preferred_element_type=jnp.float32) + bias
    ref = jax.nn.log_softmax(logits_ref, axis=-1).reshape(batch, seq, vocab)
    assert jnp.allclose(out, ref, atol=1e-4, rtol=1e-4), (
        float(jnp.max(jnp.abs(out - ref)))
    )

    # Loose check against the full-f32 reference (bf16 matmul rounding).
    ref_f32 = jax.nn.log_softmax(x @ weight_t + bias, axis=-1)
    assert jnp.allclose(out, ref_f32, atol=5e-2, rtol=5e-2)

    print("KERNEL_OK")
</pallas_src>

<mosaic_0001>
module attributes {stable_mosaic.version = 11 : i64} {
  func.func @_generator_kernel(%arg0: i32, %arg1: memref<16x32xbf16, #tpu.memory_space<vmem>>, %arg2: memref<32x128xbf16, #tpu.memory_space<vmem>>, %arg3: memref<1x128xf32, #tpu.memory_space<vmem>>, %arg4: memref<16x128xf32, #tpu.memory_space<vmem>>) attributes {dimension_semantics = [#tpu.dimension_semantics<parallel>], iteration_bounds = array<i64: 1>, scalar_prefetch = 0 : i64, scratch_operands = 0 : i64, tpu.core_type = #tpu.core_type<tc>, window_params = [{transform_indices = @transform_0, window_bounds = array<i64: 16, 32>}, {pipeline_mode = #tpu.pipeline_mode<synchronous>, transform_indices = @transform_1, window_bounds = array<i64: 32, 128>}, {pipeline_mode = #tpu.pipeline_mode<synchronous>, transform_indices = @transform_2, window_bounds = array<i64: 1, 128>}, {transform_indices = @transform_3, window_bounds = array<i64: 16, 128>}]} {
    %c0 = arith.constant 0 : index
    %c0_0 = arith.constant 0 : index
    %0 = vector.load %arg1[%c0, %c0_0] : memref<16x32xbf16, #tpu.memory_space<vmem>>, vector<16x32xbf16>
    %c0_1 = arith.constant 0 : index
    %c0_2 = arith.constant 0 : index
    %1 = vector.load %arg2[%c0_1, %c0_2] : memref<32x128xbf16, #tpu.memory_space<vmem>>, vector<32x128xbf16>
    %c0_3 = arith.constant 0 : index
    %c0_4 = arith.constant 0 : index
    %2 = vector.load %arg3[%c0_3, %c0_4] : memref<1x128xf32, #tpu.memory_space<vmem>>, vector<1x128xf32>
    %cst = arith.constant dense<0.000000e+00> : vector<16x128xf32>
    %3 = tpu.matmul %0, %1, %cst {dimension_numbers = #tpu.dot_dimension_numbers<[1], [0], [0], [1], [0, 0, 1, 1], [], []>} : vector<16x32xbf16>, vector<32x128xbf16>, vector<16x128xf32> -> vector<16x128xf32>
    %4 = vector.broadcast %2 : vector<1x128xf32> to vector<16x128xf32>
    %5 = arith.addf %3, %4 : vector<16x128xf32>
    %6 = tpu.iota {dimensions = array<i32: 1>} : vector<16x128xi32>
    %c64_i32 = arith.constant 64 : i32
    %7 = vector.broadcast %c64_i32 : i32 to vector<16x128xi32>
    %8 = arith.cmpi slt, %6, %7 : vector<16x128xi32>
    %cst_5 = arith.constant -1.000000e+30 : f32
    %9 = vector.broadcast %cst_5 : f32 to vector<16x128xf32>
    %10 = arith.select %8, %5, %9 : vector<16x128xi1>, vector<16x128xf32>
    %cst_6 = arith.constant dense<0xFF800000> : vector<16xf32>
    %11 = vector.multi_reduction <maximumf>, %10, %cst_6 [1] : vector<16x128xf32> to vector<16xf32>
    %12 = vector.shape_cast %11 : vector<16xf32> to vector<16x1xf32>
    %13 = vector.broadcast %12 : vector<16x1xf32> to vector<16x128xf32>
    %14 = arith.subf %10, %13 : vector<16x128xf32>
    %15 = math.exp %14 : vector<16x128xf32>
    %cst_7 = arith.constant dense<0.000000e+00> : vector<16xf32>
    %16 = vector.multi_reduction <add>, %15, %cst_7 [1] : vector<16x128xf32> to vector<16xf32>
    %17 = vector.shape_cast %16 : vector<16xf32> to vector<16x1xf32>
    %18 = math.log %17 : vector<16x1xf32>
    %19 = vector.broadcast %18 : vector<16x1xf32> to vector<16x128xf32>
    %20 = arith.subf %14, %19 : vector<16x128xf32>
    %c0_8 = arith.constant 0 : index
    %c0_9 = arith.constant 0 : index
    %21 = vector.load %arg4[%c0_8, %c0_9] : memref<16x128xf32, #tpu.memory_space<vmem>>, vector<16x128xf32>
    tpu.vector_store %arg4[%c0_8, %c0_9], %20 {strides = array<i32>} : memref<16x128xf32, #tpu.memory_space<vmem>>, vector<16x128xf32>,
    return
  }
  func.func @transform_0(%arg0: i32) -> (i32, i32) {
    %c0_i32 = arith.constant 0 : i32
    %c0_i32_0 = arith.constant 0 : i32
    return %arg0, %c0_i32 : i32, i32
  }
  func.func @transform_1(%arg0: i32) -> (i32, i32) {
    %c0_i32 = arith.constant 0 : i32
    %c0_i32_0 = arith.constant 0 : i32
    %c0_i32_1 = arith.constant 0 : i32
    return %c0_i32, %c0_i32_0 : i32, i32
  }
  func.func @transform_2(%arg0: i32) -> (i32, i32) {
    %c0_i32 = arith.constant 0 : i32
    %c0_i32_0 = arith.constant 0 : i32
    %c0_i32_1 = arith.constant 0 : i32
    return %c0_i32, %c0_i32_0 : i32, i32
  }
  func.func @transform_3(%arg0: i32) -> (i32, i32) {
    %c0_i32 = arith.constant 0 : i32
    %c0_i32_0 = arith.constant 0 : i32
    return %arg0, %c0_i32 : i32, i32
  }
}

</mosaic_0001>

<llo_original>
// kernel: tpu_custom_call.1
$region0: #{tpu_custom_call.1}
  #allocation0 [shape = 'u32[]', space=smem, size = 0x4, offset = 0x4, fixed_abs, tag = 'smem constant byte address 0x4 - core index']
  #allocation1 [shape = 'u32[144,128]{1,0:T(1,128)}', space=vmem, size = 0x12000, scoped, tag = 'internal scratch']
  %s0 = inlined_call_operand.hbm [shape: bf16[16,32], index: 0, kind: input, shape index: {}]
  %s1 = inlined_call_operand.hbm [shape: bf16[32,128], index: 1, kind: input, shape index: {}]
  %s2 = inlined_call_operand.vmem [shape: f32[1,128], index: 2, kind: input, shape index: {}]
  %s3 = inlined_call_operand.hbm [shape: f32[16,128], index: 3, kind: output, shape index: {}]
  %s4 = sld [smem:[#allocation0]]
  $region30: #{tpu_custom_call.1} parent=0
    _
  %s6 = ssub.s32 1, %s4
  %s7 = scalar_select 0, %s6, %s4
  $region1: #{tpu_custom_call.1} parent=0
    #allocation2 [shape = 'u8[4096]{0}', space=vmem, size = 0x1000, scoped, tag = 'input window, operand 0, single buffered']
    #allocation3 [shape = 's32[1]{0}', space=sflag, size = 0x4, scoped, tag = 'scoped memory for tpu_custom_call.1']
    #allocation4 [shape = 's32[1]{0}', space=sflag, size = 0x4, scoped, tag = 'scoped memory for tpu_custom_call.1']
    #allocation5 [shape = 'u8[8192]{0}', space=vmem, size = 0x2000, scoped, tag = 'input window, operand 1, single buffered']
    #allocation6 [shape = 's32[1]{0}', space=sflag, size = 0x4, scoped, tag = 'scoped memory for tpu_custom_call.1']
    #allocation7 [shape = 'u8[8192]{0}', space=vmem, size = 0x2000, scoped, tag = 'output window, operand 0, single buffered']
    %8 = vsyncpa [#allocation3], 0
    %9 = vsyncpa [#allocation6], 0
    %10 = vsyncpa [#allocation4], 0
    // Predicated region
    $region2: #{tpu_custom_call.1} parent=1 // pred_check
      _
    $region3: #{tpu_custom_call.1} parent=1 // pred_check_branch
      %12 = sbr.rel (0) target = $region5
    $region4: #{tpu_custom_call.1} parent=1 // pred_region
      %s14 = ssub.s32 128, 128
      %15 = vsyncadd [#allocation3], %s14
      %s16 = sshll.u32 [#allocation2], 4
      %s17 = int_to_ptr.vmem [resolvable:$true] %s16
      %22 = dma.hbm_to_vmem [thread:$0]  %s0, 128, %s17, [#allocation3], 64, 64, 4
    $region5: #{tpu_custom_call.1} parent=1 // pred_fallthru
      _
    // Predicated region
    $region6: #{tpu_custom_call.1} parent=1 // pred_check
      _
    $region7: #{tpu_custom_call.1} parent=1 // pred_check_branch
      %24 = sbr.rel (0) target = $region9
    $region8: #{tpu_custom_call.1} parent=1 // pred_region
      %s26 = ssub.s32 256, 256
      %27 = vsyncadd [#allocation6], %s26
      %s28 = sshll.u32 [#allocation5], 4
      %s29 = int_to_ptr.vmem [resolvable:$true] %s28
      %34 = dma.hbm_to_vmem [thread:$0]  %s1, 256, %s29, [#allocation6], 64, 64, 4
    $region9: #{tpu_custom_call.1} parent=1 // pred_fallthru
      _
    // Predicated region
    $region10: #{tpu_custom_call.1} parent=1 // pred_check
      _
    $region11: #{tpu_custom_call.1} parent=1 // pred_check_branch
      %36 = sbr.rel (0) target = $region13
    $region12: #{tpu_custom_call.1} parent=1 // pred_region
      _
    $region13: #{tpu_custom_call.1} parent=1 // pred_fallthru
      _
    // Predicated region
    $region14: #{tpu_custom_call.1} parent=1 // pred_check
      _
    $region15: #{tpu_custom_call.1} parent=1 // pred_check_branch
      %38 = sbr.rel (0) target = $region17
    $region16: #{tpu_custom_call.1} parent=1 // pred_region
      %39 = dma.done [#allocation3], 128
    $region17: #{tpu_custom_call.1} parent=1 // pred_fallthru
      _
    // Predicated region
    $region18: #{tpu_custom_call.1} parent=1 // pred_check
      _
    $region19: #{tpu_custom_call.1} parent=1 // pred_check_branch
      %41 = sbr.rel (0) target = $region21
    $region20: #{tpu_custom_call.1} parent=1 // pred_region
      %42 = dma.done [#allocation6], 256
    $region21: #{tpu_custom_call.1} parent=1 // pred_fallthru
      _
    %v44 = vld [vmem:[#allocation2] sm:$0xf]
    %v45 = vld [vmem:[#allocation2 + $0x4] sm:$0xf]
    %v46 = vld [vmem:[#allocation5] sm:$0xf]
    %v47 = vld [vmem:[#allocation5 + $0x4] sm:$0xf]
    %v48 = vld [vmem:[#allocation5 + $0x8] sm:$0xf]
    %v49 = vld [vmem:[#allocation5 + $0xc] sm:$0xf]
    %v50 = vld [vmem:[%s2] sm:$0x1]
    %v52 = vlaneseq
    %v53 = vshrl.u32 %v52, 7
    %v54 = vsub.s32 0, %v53
    %v55 = vrot.slane %v50, %v54
    %v59 = vunpack.c.l.b16 %v44
    %v60 = vunpack.c.l.b16 %v45
    %v61 = vpack.c.b16 %v60, %v59
    %v66 = vunpack.c.l.b16 %v46
    %v67 = vunpack.c.l.b16 %v47
    %v68 = vunpack.c.l.b16 %v48
    %v69 = vunpack.c.l.b16 %v49
    %v70 = vpack.c.b16 %v67, %v66
    %v71 = vpack.c.b16 %v69, %v68
    %vm74 = vcmask 261120
    %v76 = vsel %vm74, %v61, 0
    %78 = vmatprep.subr.bf16.mxu0 0
    %79 = vmatpush1.bf16.msra.mxu0 %v70
    %80 = vmatprep.subr.bf16.mxu0 0
    %81 = vmatpush1.bf16.msra.mxu0 %v71
    %82 = vmatprep.subr.bf16.mxu0 0
    %83 = vmatpush1.bf16.msra.mxu0 0
    %84 = vmatprep.subr.bf16.mxu0 0
    %85 = vmatpush1.bf16.msra.mxu0 0
    %86 = vmatprep.subr.bf16.mxu0 0
    %87 = vmatpush1.bf16.msra.mxu0 0
    %88 = vmatprep.subr.bf16.mxu0 0
    %89 = vmatpush1.bf16.msra.mxu0 0
    %90 = vmatprep.subr.bf16.mxu0 0
    %91 = vmatpush1.bf16.msra.mxu0 0
    %92 = vmatprep.subr.bf16.mxu0 0
    %93 = vmatpush1.bf16.msra.mxu0 0
    %94 = vmatprep.subr.bf16.mxu0 0
    %95 = vmatpush1.bf16.msra.mxu0 0
    %96 = vmatprep.subr.bf16.mxu0 0
    %97 = vmatpush1.bf16.msra.mxu0 0
    %98 = vmatprep.subr.bf16.mxu0 0
    %99 = vmatpush1.bf16.msra.mxu0 0
    %100 = vmatprep.subr.bf16.mxu0 0
    %101 = vmatpush1.bf16.msra.mxu0 0
    %102 = vmatprep.subr.bf16.mxu0 0
    %103 = vmatpush1.bf16.msra.mxu0 0
    %104 = vmatprep.subr.bf16.mxu0 0
    %105 = vmatpush1.bf16.msra.mxu0 0
    %106 = vmatprep.subr.bf16.mxu0 0
    %107 = vmatpush1.bf16.msra.mxu0 0
    %108 = vmatprep.subr.bf16.mxu0 0
    %109 = vmatpush1.bf16.msra.mxu0 0
    %110 = vmatprep.mubr.bf16.mxu0 0
    %111 = vmatmul.mubr.bf16.gmra.mrb[0].mxu0 %v76
    %v112 = vpop.f32.mrb[0].mxu0
    %v113 = vadd.f32 %v55, %v112
    %v114 = vpop.f32.mrb[0].mxu0
    %v115 = vpop.f32.mrb[0].mxu0
    %v116 = vadd.f32 %v55, %v115
    %v117 = vpop.f32.mrb[0].mxu0
    %118 = vdwg.mxu0
    %v119 = vlaneseq
    %v120 = vand.u32 %v119, 127
    %vm121 = vcmp.lt.s32.totalorder %v120, 64
    %v122 = vsel %vm121, %v113, -1e+30
    %v123 = vsel %vm121, %v116, -1e+30
    %124 = vmax.xlane.f32.xlu0 %v122
    %v125 = vpop.xlane.xlu0 %124
    %126 = vmax.xlane.f32.xlu0 %v123
    %v127 = vpop.xlane.xlu0 %126
    %v128 = vsub.f32 %v122, %v125
    %v129 = vsub.f32 %v123, %v127
    %v130 = vmul.f32 %v128, 1.442695
    %v131 = vpow.pop %v130
    %v132 = vmul.f32 %v129, 1.442695
    %v133 = vpow.pop %v132
    %134 = vadd.xlane.f32.xlu0 %v131
    %v135 = vpop.xlane.xlu0 %134
    %136 = vadd.xlane.f32.xlu0 %v133
    %v137 = vpop.xlane.xlu0 %136
    %v138 = vlog2.pop %v135
    %v139 = vmul.f32 %v138, 0.6931472
    %v140 = vlog2.pop %v137
    %v141 = vmul.f32 %v140, 0.6931472
    %v142 = vsub.f32 %v128, %v139
    %v143 = vsub.f32 %v129, %v141
    %144 = vst [vmem:[#allocation7] sm:$0xff] %v142
    %145 = vst [vmem:[#allocation7 + $0x8] sm:$0xff] %v143
    // Predicated region
    $region22: #{tpu_custom_call.1} parent=1 // pred_check
      _
    $region23: #{tpu_custom_call.1} parent=1 // pred_check_branch
      %147 = sbr.rel (0) target = $region25
    $region24: #{tpu_custom_call.1} parent=1 // pred_region
      %s149 = ssub.s32 256, 256
      %150 = vsyncadd [#allocation4], %s149
      %s151 = sshll.u32 [#allocation7], 4
      %s152 = int_to_ptr.vmem [resolvable:$true] %s151
      %157 = dma.vmem_to_hbm [thread:$0]  %s152, 256, %s3, [#allocation4], 128, 128, 8
    $region25: #{tpu_custom_call.1} parent=1 // pred_fallthru
      _
    // Predicated region
    $region26: #{tpu_custom_call.1} parent=1 // pred_check
      _
    $region27: #{tpu_custom_call.1} parent=1 // pred_check_branch
      %159 = sbr.rel (0) target = $region29
    $region28: #{tpu_custom_call.1} parent=1 // pred_region
      %160 = dma.done [#allocation4], 256
    $region29: #{tpu_custom_call.1} parent=1 // pred_fallthru
      _
    %161 = vsyncpa [#allocation3], 1
    %162 = vsyncpa [#allocation6], 1
    %163 = vsyncpa [#allocation4], 1

</llo_original>
